<compile_context>
chip_gen: v7x
topology: tpu7x:2x2x1
jax: 0.10.0
libtpu: 0.0.40
codegen_flags: <defaults>
</compile_context>

<pallas_src>
import jax
import jax.numpy as jnp
from jax.experimental import pallas as pl
from jax.experimental.pallas import tpu as pltpu


LANE = 128


def _round_up(n, m):
    return ((n + m - 1) // m) * m


def _nbytes(shape):
    n = 4  # f32
    for d in shape:
        n *= int(d)
    return n


# ------------------------------ kernel ------------------------------

def actor_critic_kernel(x_ref, h0_ref,
                        wix_ref, bix_ref,
                        wh_a_ref, bhn_a_ref, wo_a_ref, bo_a_ref,
                        wh_c_ref, bhn_c_ref, wo_c_ref, bo_c_ref,
                        valrow_ref,
                        packed_ref, hnew_ref,
                        gi_scr, hseq_scr):
    T, B, _ = gi_scr.shape
    Hp = hnew_ref.shape[-1]          # per-gate lane-aligned hidden width (multiple of 128)
    H3 = 3 * Hp

    # ---- (1) Time-invariant input projection: all T steps, both GRUs, ONE matmul ----
    gi_all = jnp.dot(x_ref[...], wix_ref[...],
                     preferred_element_type=jnp.float32) + bix_ref[...]      # (T*B, 6*Hp)
    gi_scr[...] = gi_all.reshape(T, B, 2 * H3)

    # ---- (2) Serial actor-GRU recurrence: the only truly sequential work ----
    wh_a = wh_a_ref[...]
    bhn_a = bhn_a_ref[...]

    def step(t, h):
        gi_t = gi_scr[t]                                                     # (B, 6*Hp)
        gh = jnp.dot(h, wh_a, preferred_element_type=jnp.float32)            # (B, 3*Hp)
        r = jax.nn.sigmoid(gi_t[:, 0:Hp] + gh[:, 0:Hp])
        z = jax.nn.sigmoid(gi_t[:, Hp:2 * Hp] + gh[:, Hp:2 * Hp])
        n = jnp.tanh(gi_t[:, 2 * Hp:H3] + r * (gh[:, 2 * Hp:H3] + bhn_a))
        h_new = (1.0 - z) * n + z * h                                        # pads stay 0
        hseq_scr[t] = h_new
        return h_new

    h_last = jax.lax.fori_loop(0, T, step, h0_ref[...], unroll=True)
    hnew_ref[...] = h_last

    # ---- (3) Batched non-recurrent tail over all T*B rows ----
    h_all = hseq_scr[...].reshape(T * B, Hp)

    # Actor head + softmax.  wo_a/bo_a pre-padded to the 128-lane output block; pad
    # bias is -1e30 so padded lanes contribute exp(..) == 0 exactly.
    logits = jnp.dot(h_all, wo_a_ref[...],
                     preferred_element_type=jnp.float32) + bo_a_ref[...]     # (T*B, OUT_W)
    m = jnp.max(logits, axis=-1, keepdims=True)
    e = jnp.exp(logits - m)
    s = jnp.sum(e, axis=-1, keepdims=True)
    r0 = pl.reciprocal(s, approx=True)           # EUP approx reciprocal
    inv_s = r0 * (2.0 - s * r0)                  # one Newton step -> ~f32 accuracy
    probs = e * inv_s                            # (T*B, OUT_W); padded lanes exactly 0

    # Critic GRU on (x_t, h_a_t): no recurrence (its hidden update is discarded).
    gi_c = gi_scr[...].reshape(T * B, 2 * H3)[:, H3:]                        # (T*B, 3*Hp)
    gh_c = jnp.dot(h_all, wh_c_ref[...], preferred_element_type=jnp.float32)
    r_c = jax.nn.sigmoid(gi_c[:, 0:Hp] + gh_c[:, 0:Hp])
    z_c = jax.nn.sigmoid(gi_c[:, Hp:2 * Hp] + gh_c[:, Hp:2 * Hp])
    n_c = jnp.tanh(gi_c[:, 2 * Hp:H3] + r_c * (gh_c[:, 2 * Hp:H3] + bhn_c_ref[...]))
    h_c = (1.0 - z_c) * n_c + z_c * h_all                                    # (T*B, Hp)

    # Critic head: VPU multiply + lane reduction (no 1-column MXU matmul).
    value = jnp.sum(h_c * wo_c_ref[...], axis=-1, keepdims=True) + bo_c_ref[...]  # (T*B,1)

    # Packed lane-dense output [probs | value @ lane A | zeros]: one unmasked store.
    packed_ref[...] = probs + value * valrow_ref[...]


# ------------------------------ wrappers ------------------------------

_WEIGHT_NAMES = ("wix", "bix",
                 "wh_a", "bhn_a", "wo_a", "bo_a",
                 "wh_c", "bhn_c", "wo_c", "bo_c",
                 "valrow")


def actor_critic_rollout(x_seq, hidden, kparams):
    """x_seq: (T, B, S) f32; hidden: (1, B, H) f32 (PyTorch GRU hidden layout).

    Runs T chained ActorCritic.forward steps in ONE kernel invocation.
    Returns (action_probs (T, B, A), values (T, B, 1), new_hidden (1, B, H))."""
    T, B, S = x_seq.shape
    H = hidden.shape[-1]
    Hp = _round_up(H, LANE)
    A = kparams["action_dim"]
    OUT_W = kparams["valrow"].shape[-1]

    x_flat = x_seq.reshape(T * B, S)                       # free relayout outside kernel
    h0 = jnp.pad(hidden[0], ((0, 0), (0, Hp - H)))         # padded lanes exactly 0

    weights = tuple(kparams[k] for k in _WEIGHT_NAMES)

    flops = (2 * T * B * S * 6 * Hp            # fused input projection
             + 2 * 2 * T * B * Hp * 3 * Hp     # actor + critic hidden projections
             + 2 * T * B * Hp * OUT_W          # actor head
             + 2 * T * B * Hp)                 # critic head
    transcendentals = T * B * (6 * Hp + OUT_W)
    bytes_accessed = (_nbytes(x_flat.shape) + _nbytes(h0.shape)
                      + sum(_nbytes(w.shape) for w in weights)
                      + _nbytes((T * B, OUT_W)) + _nbytes((B, Hp)))

    packed, h_new = pl.pallas_call(
        actor_critic_kernel,
        out_shape=(
            jax.ShapeDtypeStruct((T * B, OUT_W), jnp.float32),   # packed [probs|value|0]
            jax.ShapeDtypeStruct((B, Hp), jnp.float32),          # final hidden
        ),
        scratch_shapes=[
            pltpu.VMEM((T, B, 6 * Hp), jnp.float32),   # gi for all steps, both GRUs
            pltpu.VMEM((T, B, Hp), jnp.float32),       # per-step actor hidden h_a(t)
        ],
        cost_estimate=pl.CostEstimate(flops=flops,
                                      transcendentals=transcendentals,
                                      bytes_accessed=bytes_accessed),
    )(x_flat, h0, *weights)

    packed = packed.reshape(T, B, OUT_W)
    probs = packed[..., :A]
    values = packed[..., A:A + 1]
    return probs, values, h_new[:, :H][None]


def actor_critic_forward(x, hidden, kparams):
    """Single ActorCritic.forward step (matches the PyTorch module API).

    x: (B, S); hidden: (1, B, H).
    Returns (action_probs (1,B,A), value (1,B,1), new_hidden (1,B,H))."""
    return actor_critic_rollout(x[None], hidden, kparams)


# -------------------- parameter construction (deterministic) --------------------

def init_params(key, state_dim, hidden_dim, action_dim):
    """Math-layout parameters (weights transposed vs PyTorch: x @ W)."""
    k = 1.0 / jnp.sqrt(jnp.float32(hidden_dim))

    def u(key, shape):
        return jax.random.uniform(key, shape, jnp.float32, -k, k)

    keys = jax.random.split(key, 12)
    return {
        # Actor GRU
        "wi_a": u(keys[0], (state_dim, 3 * hidden_dim)),
        "wh_a": u(keys[1], (hidden_dim, 3 * hidden_dim)),
        "bi_a": u(keys[2], (1, 3 * hidden_dim)),
        "bh_a": u(keys[3], (1, 3 * hidden_dim)),
        # Actor output Linear (H, A)
        "wo_a": u(keys[4], (hidden_dim, action_dim)),
        "bo_a": u(keys[5], (1, action_dim)),
        # Critic GRU
        "wi_c": u(keys[6], (state_dim, 3 * hidden_dim)),
        "wh_c": u(keys[7], (hidden_dim, 3 * hidden_dim)),
        "bi_c": u(keys[8], (1, 3 * hidden_dim)),
        "bh_c": u(keys[9], (1, 3 * hidden_dim)),
        # Critic output Linear (H, 1)
        "wo_c": u(keys[10], (hidden_dim, 1)),
        "bo_c": u(keys[11], (1, 1)),
    }


def prepare_kernel_params(params, H):
    """One-time relayout: per-gate 128-lane padding (tile-aligned gate slices), hidden
    rows padded to Hp, actor+critic input projections fused, r/z hidden biases folded
    into the input biases, actor head padded to the 128-lane packed-output block."""
    Hp = _round_up(H, LANE)
    A = params["wo_a"].shape[-1]
    OUT_W = _round_up(A + 1, LANE)

    def pad_lanes(w, width):
        return jnp.pad(w, ((0, 0), (0, width - w.shape[-1])))

    def pad_gate_cols(w):
        # (in, 3H) -> (in, 3*Hp): gate g's H columns live at lanes [g*Hp, g*Hp + H).
        return jnp.concatenate(
            [pad_lanes(w[:, g * H:(g + 1) * H], Hp) for g in range(3)], axis=1)

    def pad_rows(w):
        # (H, N) -> (Hp, N); padded hidden lanes are always zero so extra rows are zero.
        return jnp.pad(w, ((0, Hp - w.shape[0]), (0, 0)))

    def fold_bias(bi, bh):
        # Fold r/z hidden biases into the input bias; keep the n-gate hidden bias apart
        # (it sits inside r * (h Whn + bhn)).
        folded = jnp.concatenate([pad_lanes(bi[:, :H] + bh[:, :H], Hp),
                                  pad_lanes(bi[:, H:2 * H] + bh[:, H:2 * H], Hp),
                                  pad_lanes(bi[:, 2 * H:], Hp)], axis=1)
        return folded, pad_lanes(bh[:, 2 * H:], Hp)

    bix_a, bhn_a = fold_bias(params["bi_a"], params["bh_a"])
    bix_c, bhn_c = fold_bias(params["bi_c"], params["bh_c"])

    # Actor head padded to OUT_W lanes; pad bias -1e30 => exp() underflows to exactly 0
    # so padded lanes contribute nothing to the softmax sum and yield prob 0.
    wo_a = pad_lanes(pad_rows(params["wo_a"]), OUT_W)
    bo_a = jnp.concatenate(
        [params["bo_a"], jnp.full((1, OUT_W - A), -1e30, jnp.float32)], axis=1)

    # One-hot row used to inject the critic value at lane A of the packed output.
    valrow = jnp.zeros((1, OUT_W), jnp.float32).at[0, A].set(1.0)

    return {
        "wix": jnp.concatenate([pad_gate_cols(params["wi_a"]),
                                pad_gate_cols(params["wi_c"])], axis=1),   # (S, 6*Hp)
        "bix": jnp.concatenate([bix_a, bix_c], axis=1),                    # (1, 6*Hp)
        "wh_a": pad_rows(pad_gate_cols(params["wh_a"])),                   # (Hp, 3*Hp)
        "bhn_a": bhn_a,                                                    # (1, Hp)
        "wo_a": wo_a,                                                      # (Hp, OUT_W)
        "bo_a": bo_a,                                                      # (1, OUT_W)
        "wh_c": pad_rows(pad_gate_cols(params["wh_c"])),                   # (Hp, 3*Hp)
        "bhn_c": bhn_c,                                                    # (1, Hp)
        "wo_c": pad_lanes(params["wo_c"].T, Hp),                           # (1, Hp)
        "bo_c": params["bo_c"],                                            # (1, 1)
        "valrow": valrow,                                                  # (1, OUT_W)
        "action_dim": A,                                                   # python int
    }


# -------------------- pure-JAX reference for validation --------------------

def reference_forward(x, hidden, params):
    H = hidden.shape[-1]
    h0 = hidden[0]
    dot = lambda a, b: jnp.dot(a, b, precision=jax.lax.Precision.HIGHEST)

    def gru(x, h, wi, wh, bi, bh):
        gi = dot(x, wi) + bi
        gh = dot(h, wh) + bh
        r = jax.nn.sigmoid(gi[:, :H] + gh[:, :H])
        z = jax.nn.sigmoid(gi[:, H:2 * H] + gh[:, H:2 * H])
        n = jnp.tanh(gi[:, 2 * H:] + r * gh[:, 2 * H:])
        return (1.0 - z) * n + z * h

    h_a = gru(x, h0, params["wi_a"], params["wh_a"], params["bi_a"], params["bh_a"])
    probs = jax.nn.softmax(dot(h_a, params["wo_a"]) + params["bo_a"], axis=-1)
    h_c = gru(x, h_a, params["wi_c"], params["wh_c"], params["bi_c"], params["bh_c"])
    value = dot(h_c, params["wo_c"]) + params["bo_c"]
    return probs[None], value[None], h_a[None]


if __name__ == "__main__":
    state_dim, hidden_dim, action_dim = 8, 32, 16
    batch, steps = 8, 8

    key = jax.random.PRNGKey(0)
    kp, kx, kh = jax.random.split(key, 3)
    params = init_params(kp, state_dim, hidden_dim, action_dim)
    kparams = prepare_kernel_params(params, hidden_dim)

    x_seq = jax.random.normal(kx, (steps, batch, state_dim), jnp.float32)
    hidden = jax.random.normal(kh, (1, batch, hidden_dim), jnp.float32)

    # ---- single ActorCritic.forward step (matches the PyTorch module API) ----
    probs, value, h_new = actor_critic_forward(x_seq[0], hidden, kparams)
    jax.block_until_ready((probs, value, h_new))
    assert probs.shape == (1, batch, action_dim)
    assert value.shape == (1, batch, 1)
    assert h_new.shape == (1, batch, hidden_dim)

    rp, rv, rh = reference_forward(x_seq[0], hidden, params)
    # Tolerances cover matmul-precision differences between Mosaic and XLA; observed
    # error is typically far below these bounds.
    assert jnp.allclose(probs, rp, atol=2e-3, rtol=2e-3)
    assert jnp.allclose(value, rv, atol=2e-3, rtol=2e-3)
    assert jnp.allclose(h_new, rh, atol=2e-3, rtol=2e-3)

    # ---- fused T-step rollout (ONE kernel invocation) vs step-by-step reference ----
    probs_seq, value_seq, h_last = actor_critic_rollout(x_seq, hidden, kparams)
    jax.block_until_ready((probs_seq, value_seq, h_last))
    assert probs_seq.shape == (steps, batch, action_dim)
    assert value_seq.shape == (steps, batch, 1)
    assert h_last.shape == (1, batch, hidden_dim)

    h_ref = hidden
    for t in range(steps):
        rp, rv, h_ref = reference_forward(x_seq[t], h_ref, params)
        assert jnp.allclose(probs_seq[t], rp[0], atol=1e-2, rtol=1e-2), f"probs step {t}"
        assert jnp.allclose(value_seq[t], rv[0], atol=1e-2, rtol=1e-2), f"value step {t}"
    assert jnp.allclose(h_last, h_ref, atol=1e-2, rtol=1e-2)

    print("KERNEL_OK")
</pallas_src>

<mosaic_0001>
module attributes {stable_mosaic.version = 11 : i64} {
  func.func @actor_critic_kernel(%arg0: memref<8x8xf32, #tpu.memory_space<vmem>>, %arg1: memref<8x128xf32, #tpu.memory_space<vmem>>, %arg2: memref<8x768xf32, #tpu.memory_space<vmem>>, %arg3: memref<1x768xf32, #tpu.memory_space<vmem>>, %arg4: memref<128x384xf32, #tpu.memory_space<vmem>>, %arg5: memref<1x128xf32, #tpu.memory_space<vmem>>, %arg6: memref<128x128xf32, #tpu.memory_space<vmem>>, %arg7: memref<1x128xf32, #tpu.memory_space<vmem>>, %arg8: memref<128x384xf32, #tpu.memory_space<vmem>>, %arg9: memref<1x128xf32, #tpu.memory_space<vmem>>, %arg10: memref<1x128xf32, #tpu.memory_space<vmem>>, %arg11: memref<1x1xf32, #tpu.memory_space<vmem>>, %arg12: memref<1x128xf32, #tpu.memory_space<vmem>>, %arg13: memref<8x128xf32, #tpu.memory_space<vmem>>, %arg14: memref<8x128xf32, #tpu.memory_space<vmem>>, %arg15: memref<1x8x768xf32, #tpu.memory_space<vmem>>, %arg16: memref<1x8x128xf32, #tpu.memory_space<vmem>>) attributes {dimension_semantics = [], scalar_prefetch = 0 : i64, scratch_operands = 2 : i64, tpu.core_type = #tpu.core_type<tc>} {
    %c0 = arith.constant 0 : index
    %c0_0 = arith.constant 0 : index
    %0 = vector.load %arg0[%c0, %c0_0] : memref<8x8xf32, #tpu.memory_space<vmem>>, vector<8x8xf32>
    %c0_1 = arith.constant 0 : index
    %c0_2 = arith.constant 0 : index
    %1 = vector.load %arg2[%c0_1, %c0_2] : memref<8x768xf32, #tpu.memory_space<vmem>>, vector<8x768xf32>
    %cst = arith.constant dense<0.000000e+00> : vector<8x768xf32>
    %2 = tpu.matmul %0, %1, %cst {dimension_numbers = #tpu.dot_dimension_numbers<[1], [0], [0], [1], [0, 0, 1, 1], [], []>} : vector<8x8xf32>, vector<8x768xf32>, vector<8x768xf32> -> vector<8x768xf32>
    %c0_3 = arith.constant 0 : index
    %c0_4 = arith.constant 0 : index
    %3 = vector.load %arg3[%c0_3, %c0_4] : memref<1x768xf32, #tpu.memory_space<vmem>>, vector<1x768xf32>
    %4 = vector.broadcast %3 : vector<1x768xf32> to vector<8x768xf32>
    %5 = arith.addf %2, %4 : vector<8x768xf32>
    %6 = vector.shape_cast %5 : vector<8x768xf32> to vector<1x8x768xf32>
    %c0_5 = arith.constant 0 : index
    %c0_6 = arith.constant 0 : index
    %c0_7 = arith.constant 0 : index
    %7 = vector.load %arg15[%c0_5, %c0_6, %c0_7] : memref<1x8x768xf32, #tpu.memory_space<vmem>>, vector<1x8x768xf32>
    tpu.vector_store %arg15[%c0_5, %c0_6, %c0_7], %6 {strides = array<i32>} : memref<1x8x768xf32, #tpu.memory_space<vmem>>, vector<1x8x768xf32>,
    %c0_8 = arith.constant 0 : index
    %c0_9 = arith.constant 0 : index
    %8 = vector.load %arg4[%c0_8, %c0_9] : memref<128x384xf32, #tpu.memory_space<vmem>>, vector<128x384xf32>
    %c0_10 = arith.constant 0 : index
    %c0_11 = arith.constant 0 : index
    %9 = vector.load %arg5[%c0_10, %c0_11] : memref<1x128xf32, #tpu.memory_space<vmem>>, vector<1x128xf32>
    %c0_12 = arith.constant 0 : index
    %c0_13 = arith.constant 0 : index
    %10 = vector.load %arg1[%c0_12, %c0_13] : memref<8x128xf32, #tpu.memory_space<vmem>>, vector<8x128xf32>
    %c0_i32 = arith.constant 0 : i32
    %11 = arith.index_cast %c0_i32 : i32 to index
    %c0_14 = arith.constant 0 : index
    %c0_15 = arith.constant 0 : index
    %12 = vector.load %arg15[%11, %c0_14, %c0_15] : memref<1x8x768xf32, #tpu.memory_space<vmem>>, vector<1x8x768xf32>
    %13 = vector.shape_cast %12 : vector<1x8x768xf32> to vector<8x768xf32>
    %cst_16 = arith.constant dense<0.000000e+00> : vector<8x384xf32>
    %14 = tpu.matmul %10, %8, %cst_16 {dimension_numbers = #tpu.dot_dimension_numbers<[1], [0], [0], [1], [0, 0, 1, 1], [], []>} : vector<8x128xf32>, vector<128x384xf32>, vector<8x384xf32> -> vector<8x384xf32>
    %15 = vector.extract_strided_slice %13 {offsets = [0, 0], sizes = [8, 128], strides = [1, 1]} : vector<8x768xf32> to vector<8x128xf32>
    %16 = vector.extract_strided_slice %14 {offsets = [0, 0], sizes = [8, 128], strides = [1, 1]} : vector<8x384xf32> to vector<8x128xf32>
    %17 = arith.addf %15, %16 : vector<8x128xf32>
    %18 = arith.negf %17 : vector<8x128xf32>
    %19 = math.exp %18 : vector<8x128xf32>
    %cst_17 = arith.constant 1.000000e+00 : f32
    %20 = vector.broadcast %cst_17 : f32 to vector<8x128xf32>
    %21 = arith.addf %20, %19 : vector<8x128xf32>
    %22 = arith.divf %20, %21 : vector<8x128xf32>
    %23 = vector.extract_strided_slice %13 {offsets = [0, 128], sizes = [8, 128], strides = [1, 1]} : vector<8x768xf32> to vector<8x128xf32>
    %24 = vector.extract_strided_slice %14 {offsets = [0, 128], sizes = [8, 128], strides = [1, 1]} : vector<8x384xf32> to vector<8x128xf32>
    %25 = arith.addf %23, %24 : vector<8x128xf32>
    %26 = arith.negf %25 : vector<8x128xf32>
    %27 = math.exp %26 : vector<8x128xf32>
    %cst_18 = arith.constant 1.000000e+00 : f32
    %28 = vector.broadcast %cst_18 : f32 to vector<8x128xf32>
    %29 = arith.addf %28, %27 : vector<8x128xf32>
    %30 = arith.divf %28, %29 : vector<8x128xf32>
    %31 = vector.extract_strided_slice %13 {offsets = [0, 256], sizes = [8, 128], strides = [1, 1]} : vector<8x768xf32> to vector<8x128xf32>
    %32 = vector.extract_strided_slice %14 {offsets = [0, 256], sizes = [8, 128], strides = [1, 1]} : vector<8x384xf32> to vector<8x128xf32>
    %33 = vector.broadcast %9 : vector<1x128xf32> to vector<8x128xf32>
    %34 = arith.addf %32, %33 : vector<8x128xf32>
    %35 = arith.mulf %22, %34 : vector<8x128xf32>
    %36 = arith.addf %31, %35 : vector<8x128xf32>
    %37 = math.tanh %36 : vector<8x128xf32>
    %cst_19 = arith.constant 1.000000e+00 : f32
    %38 = vector.broadcast %cst_19 : f32 to vector<8x128xf32>
    %39 = arith.subf %38, %30 : vector<8x128xf32>
    %40 = arith.mulf %39, %37 : vector<8x128xf32>
    %41 = arith.mulf %30, %10 : vector<8x128xf32>
    %42 = arith.addf %40, %41 : vector<8x128xf32>
    %43 = arith.index_cast %c0_i32 : i32 to index
    %c0_20 = arith.constant 0 : index
    %c0_21 = arith.constant 0 : index
    %44 = vector.load %arg16[%43, %c0_20, %c0_21] : memref<1x8x128xf32, #tpu.memory_space<vmem>>, vector<1x8x128xf32>
    %45 = vector.shape_cast %44 : vector<1x8x128xf32> to vector<8x128xf32>
    %46 = vector.shape_cast %42 : vector<8x128xf32> to vector<1x8x128xf32>
    tpu.vector_store %arg16[%43, %c0_20, %c0_21], %46 {strides = array<i32>} : memref<1x8x128xf32, #tpu.memory_space<vmem>>, vector<1x8x128xf32>,
    %c1_i32 = arith.constant 1 : i32
    %c0_22 = arith.constant 0 : index
    %c0_23 = arith.constant 0 : index
    %47 = vector.load %arg14[%c0_22, %c0_23] : memref<8x128xf32, #tpu.memory_space<vmem>>, vector<8x128xf32>
    tpu.vector_store %arg14[%c0_22, %c0_23], %42 {strides = array<i32>} : memref<8x128xf32, #tpu.memory_space<vmem>>, vector<8x128xf32>,
    %c0_24 = arith.constant 0 : index
    %c0_25 = arith.constant 0 : index
    %c0_26 = arith.constant 0 : index
    %48 = vector.load %arg16[%c0_24, %c0_25, %c0_26] : memref<1x8x128xf32, #tpu.memory_space<vmem>>, vector<1x8x128xf32>
    %49 = vector.shape_cast %48 : vector<1x8x128xf32> to vector<8x128xf32>
    %c0_27 = arith.constant 0 : index
    %c0_28 = arith.constant 0 : index
    %50 = vector.load %arg6[%c0_27, %c0_28] : memref<128x128xf32, #tpu.memory_space<vmem>>, vector<128x128xf32>
    %cst_29 = arith.constant dense<0.000000e+00> : vector<8x128xf32>
    %51 = tpu.matmul %49, %50, %cst_29 {dimension_numbers = #tpu.dot_dimension_numbers<[1], [0], [0], [1], [0, 0, 1, 1], [], []>} : vector<8x128xf32>, vector<128x128xf32>, vector<8x128xf32> -> vector<8x128xf32>
    %c0_30 = arith.constant 0 : index
    %c0_31 = arith.constant 0 : index
    %52 = vector.load %arg7[%c0_30, %c0_31] : memref<1x128xf32, #tpu.memory_space<vmem>>, vector<1x128xf32>
    %53 = vector.broadcast %52 : vector<1x128xf32> to vector<8x128xf32>
    %54 = arith.addf %51, %53 : vector<8x128xf32>
    %cst_32 = arith.constant dense<0xFF800000> : vector<8xf32>
    %55 = vector.multi_reduction <maximumf>, %54, %cst_32 [1] : vector<8x128xf32> to vector<8xf32>
    %56 = vector.shape_cast %55 : vector<8xf32> to vector<8x1xf32>
    %57 = vector.broadcast %56 : vector<8x1xf32> to vector<8x128xf32>
    %58 = arith.subf %54, %57 : vector<8x128xf32>
    %59 = math.exp %58 : vector<8x128xf32>
    %cst_33 = arith.constant dense<0.000000e+00> : vector<8xf32>
    %60 = vector.multi_reduction <add>, %59, %cst_33 [1] : vector<8x128xf32> to vector<8xf32>
    %61 = vector.shape_cast %60 : vector<8xf32> to vector<8x1xf32>
    %62 = tpu.reciprocal %61 {approx = true} : vector<8x1xf32> -> vector<8x1xf32>
    %63 = arith.mulf %61, %62 : vector<8x1xf32>
    %cst_34 = arith.constant 2.000000e+00 : f32
    %64 = vector.broadcast %cst_34 : f32 to vector<8x1xf32>
    %65 = arith.subf %64, %63 : vector<8x1xf32>
    %66 = arith.mulf %62, %65 : vector<8x1xf32>
    %67 = vector.broadcast %66 : vector<8x1xf32> to vector<8x128xf32>
    %68 = arith.mulf %59, %67 : vector<8x128xf32>
    %c0_35 = arith.constant 0 : index
    %c0_36 = arith.constant 0 : index
    %c0_37 = arith.constant 0 : index
    %69 = vector.load %arg15[%c0_35, %c0_36, %c0_37] : memref<1x8x768xf32, #tpu.memory_space<vmem>>, vector<1x8x768xf32>
    %70 = vector.shape_cast %69 : vector<1x8x768xf32> to vector<8x768xf32>
    %71 = vector.extract_strided_slice %70 {offsets = [0, 384], sizes = [8, 384], strides = [1, 1]} : vector<8x768xf32> to vector<8x384xf32>
    %c0_38 = arith.constant 0 : index
    %c0_39 = arith.constant 0 : index
    %72 = vector.load %arg8[%c0_38, %c0_39] : memref<128x384xf32, #tpu.memory_space<vmem>>, vector<128x384xf32>
    %cst_40 = arith.constant dense<0.000000e+00> : vector<8x384xf32>
    %73 = tpu.matmul %49, %72, %cst_40 {dimension_numbers = #tpu.dot_dimension_numbers<[1], [0], [0], [1], [0, 0, 1, 1], [], []>} : vector<8x128xf32>, vector<128x384xf32>, vector<8x384xf32> -> vector<8x384xf32>
    %74 = vector.extract_strided_slice %71 {offsets = [0, 0], sizes = [8, 128], strides = [1, 1]} : vector<8x384xf32> to vector<8x128xf32>
    %75 = vector.extract_strided_slice %73 {offsets = [0, 0], sizes = [8, 128], strides = [1, 1]} : vector<8x384xf32> to vector<8x128xf32>
    %76 = arith.addf %74, %75 : vector<8x128xf32>
    %77 = arith.negf %76 : vector<8x128xf32>
    %78 = math.exp %77 : vector<8x128xf32>
    %cst_41 = arith.constant 1.000000e+00 : f32
    %79 = vector.broadcast %cst_41 : f32 to vector<8x128xf32>
    %80 = arith.addf %79, %78 : vector<8x128xf32>
    %81 = arith.divf %79, %80 : vector<8x128xf32>
    %82 = vector.extract_strided_slice %71 {offsets = [0, 128], sizes = [8, 128], strides = [1, 1]} : vector<8x384xf32> to vector<8x128xf32>
    %83 = vector.extract_strided_slice %73 {offsets = [0, 128], sizes = [8, 128], strides = [1, 1]} : vector<8x384xf32> to vector<8x128xf32>
    %84 = arith.addf %82, %83 : vector<8x128xf32>
    %85 = arith.negf %84 : vector<8x128xf32>
    %86 = math.exp %85 : vector<8x128xf32>
    %cst_42 = arith.constant 1.000000e+00 : f32
    %87 = vector.broadcast %cst_42 : f32 to vector<8x128xf32>
    %88 = arith.addf %87, %86 : vector<8x128xf32>
    %89 = arith.divf %87, %88 : vector<8x128xf32>
    %90 = vector.extract_strided_slice %71 {offsets = [0, 256], sizes = [8, 128], strides = [1, 1]} : vector<8x384xf32> to vector<8x128xf32>
    %91 = vector.extract_strided_slice %73 {offsets = [0, 256], sizes = [8, 128], strides = [1, 1]} : vector<8x384xf32> to vector<8x128xf32>
    %c0_43 = arith.constant 0 : index
    %c0_44 = arith.constant 0 : index
    %92 = vector.load %arg9[%c0_43, %c0_44] : memref<1x128xf32, #tpu.memory_space<vmem>>, vector<1x128xf32>
    %93 = vector.broadcast %92 : vector<1x128xf32> to vector<8x128xf32>
    %94 = arith.addf %91, %93 : vector<8x128xf32>
    %95 = arith.mulf %81, %94 : vector<8x128xf32>
    %96 = arith.addf %90, %95 : vector<8x128xf32>
    %97 = math.tanh %96 : vector<8x128xf32>
    %cst_45 = arith.constant 1.000000e+00 : f32
    %98 = vector.broadcast %cst_45 : f32 to vector<8x128xf32>
    %99 = arith.subf %98, %89 : vector<8x128xf32>
    %100 = arith.mulf %99, %97 : vector<8x128xf32>
    %101 = arith.mulf %89, %49 : vector<8x128xf32>
    %102 = arith.addf %100, %101 : vector<8x128xf32>
    %c0_46 = arith.constant 0 : index
    %c0_47 = arith.constant 0 : index
    %103 = vector.load %arg10[%c0_46, %c0_47] : memref<1x128xf32, #tpu.memory_space<vmem>>, vector<1x128xf32>
    %104 = vector.broadcast %103 : vector<1x128xf32> to vector<8x128xf32>
    %105 = arith.mulf %102, %104 : vector<8x128xf32>
    %cst_48 = arith.constant dense<0.000000e+00> : vector<8xf32>
    %106 = vector.multi_reduction <add>, %105, %cst_48 [1] : vector<8x128xf32> to vector<8xf32>
    %107 = vector.shape_cast %106 : vector<8xf32> to vector<8x1xf32>
    %c0_49 = arith.constant 0 : index
    %c0_50 = arith.constant 0 : index
    %108 = vector.load %arg11[%c0_49, %c0_50] : memref<1x1xf32, #tpu.memory_space<vmem>>, vector<1x1xf32>
    %109 = vector.broadcast %108 : vector<1x1xf32> to vector<8x1xf32>
    %110 = arith.addf %107, %109 : vector<8x1xf32>
    %c0_51 = arith.constant 0 : index
    %c0_52 = arith.constant 0 : index
    %111 = vector.load %arg12[%c0_51, %c0_52] : memref<1x128xf32, #tpu.memory_space<vmem>>, vector<1x128xf32>
    %112 = vector.broadcast %110 : vector<8x1xf32> to vector<8x128xf32>
    %113 = vector.broadcast %111 : vector<1x128xf32> to vector<8x128xf32>
    %114 = arith.mulf %112, %113 : vector<8x128xf32>
    %115 = arith.addf %68, %114 : vector<8x128xf32>
    %c0_53 = arith.constant 0 : index
    %c0_54 = arith.constant 0 : index
    %116 = vector.load %arg13[%c0_53, %c0_54] : memref<8x128xf32, #tpu.memory_space<vmem>>, vector<8x128xf32>
    tpu.vector_store %arg13[%c0_53, %c0_54], %115 {strides = array<i32>} : memref<8x128xf32, #tpu.memory_space<vmem>>, vector<8x128xf32>,
    return
  }
}

</mosaic_0001>

<llo_original>
// kernel: tpu_custom_call.1
$region0: #{tpu_custom_call.1}
  #allocation0 [shape = 'u32[]', space=smem, size = 0x4, offset = 0x4, fixed_abs, tag = 'smem constant byte address 0x4 - core index']
  #allocation1 [shape = 'u32[144,128]{1,0:T(1,128)}', space=vmem, size = 0x12000, scoped, tag = 'internal scratch']
  #allocation2 [shape = 'f32[1,8,768]{2,1,0:T(8,128)}', space=vmem, size = 0x6000, scoped, tag = 'scratch operand']
  #allocation3 [shape = 'f32[1,8,128]{2,1,0:T(8,128)}', space=vmem, size = 0x1000, scoped, tag = 'scratch operand']
  #allocation4 [shape = 'f32[1,1]{1,0:T(1,128)S(1)}', space=vmem, size = 0x200, scoped, tag = 'scoped memory for tpu_custom_call.1']
  %s0 = inlined_call_operand.hbm [shape: f32[8,8], index: 0, kind: input, shape index: {}]
  %s1 = inlined_call_operand.hbm [shape: f32[8,128], index: 1, kind: input, shape index: {}]
  %s2 = inlined_call_operand.hbm [shape: f32[8,768], index: 2, kind: input, shape index: {}]
  %s3 = inlined_call_operand.vmem [shape: f32[1,768], index: 3, kind: input, shape index: {}]
  %s4 = inlined_call_operand.hbm [shape: f32[128,384], index: 4, kind: input, shape index: {}]
  %s5 = inlined_call_operand.vmem [shape: f32[1,128], index: 5, kind: input, shape index: {}]
  %s6 = inlined_call_operand.hbm [shape: f32[128,128], index: 6, kind: input, shape index: {}]
  %s7 = inlined_call_operand.vmem [shape: f32[1,128], index: 7, kind: input, shape index: {}]
  %s8 = inlined_call_operand.hbm [shape: f32[128,384], index: 8, kind: input, shape index: {}]
  %s9 = inlined_call_operand.vmem [shape: f32[1,128], index: 9, kind: input, shape index: {}]
  %s10 = inlined_call_operand.vmem [shape: f32[1,128], index: 10, kind: input, shape index: {}]
  %s11 = inlined_call_operand.<no memory space> [shape: f32[1,1], index: 11, kind: input, shape index: {}]
  %s12 = inlined_call_operand.vmem [shape: f32[1,128], index: 12, kind: input, shape index: {}]
  %s13 = inlined_call_operand.hbm [shape: f32[8,128], index: 13, kind: output, shape index: {0}]
  %s14 = inlined_call_operand.hbm [shape: f32[8,128], index: 14, kind: output, shape index: {1}]
  %15 = xla_tuple %s13, %s14
  %s16 = sld [smem:[#allocation0]]
  $region94: #{tpu_custom_call.1} parent=0
    _
  %s18 = ssub.s32 1, %s16
  %s19 = scalar_select 0, %s18, %s16
  %v20 = vstv %s11
  %21 = vst [vmem:[#allocation4] sm:$0x1] %v20
  $region1: #{tpu_custom_call.1} parent=0
    #allocation5 [shape = 'u8[4096]{0}', space=vmem, size = 0x1000, scoped, tag = 'input window, operand 0, single buffered']
    #allocation6 [shape = 's32[1]{0}', space=sflag, size = 0x4, scoped, tag = 'scoped memory for tpu_custom_call.1']
    #allocation7 [shape = 's32[1]{0}', space=sflag, size = 0x4, scoped, tag = 'scoped memory for tpu_custom_call.1']
    #allocation8 [shape = 'u8[4096]{0}', space=vmem, size = 0x1000, scoped, tag = 'input window, operand 1, single buffered']
    #allocation9 [shape = 's32[1]{0}', space=sflag, size = 0x4, scoped, tag = 'scoped memory for tpu_custom_call.1']
    #allocation10 [shape = 'u8[24576]{0}', space=vmem, size = 0x6000, scoped, tag = 'input window, operand 2, single buffered']
    #allocation11 [shape = 'u8[196608]{0}', space=vmem, size = 0x30000, scoped, tag = 'input window, operand 4, single buffered']
    #allocation12 [shape = 's32[1]{0}', space=sflag, size = 0x4, scoped, tag = 'scoped memory for tpu_custom_call.1']
    #allocation13 [shape = 'u8[65536]{0}', space=vmem, size = 0x10000, scoped, tag = 'input window, operand 6, single buffered']
    #allocation14 [shape = 'u8[196608]{0}', space=vmem, size = 0x30000, scoped, tag = 'input window, operand 8, single buffered']
    #allocation15 [shape = 's32[1]{0}', space=sflag, size = 0x4, scoped, tag = 'scoped memory for tpu_custom_call.1']
    #allocation16 [shape = 'u8[4096]{0}', space=vmem, size = 0x1000, scoped, tag = 'output window, operand 0, single buffered']
    #allocation17 [shape = 'u8[4096]{0}', space=vmem, size = 0x1000, scoped, tag = 'output window, operand 1, single buffered']
    #allocation18 [shape = 's32[1]{0}', space=sflag, size = 0x4, scoped, tag = 'scoped memory for tpu_custom_call.1']
    %22 = vsyncpa [#allocation6], 0
    %23 = vsyncpa [#allocation9], 0
    %24 = vsyncpa [#allocation12], 0
    %25 = vsyncpa [#allocation15], 0
    %26 = vsyncpa [#allocation7], 0
    %27 = vsyncpa [#allocation18], 0
    // Predicated region
    $region2: #{tpu_custom_call.1} parent=1 // pred_check
      _
    $region3: #{tpu_custom_call.1} parent=1 // pred_check_branch
      %29 = sbr.rel (0) target = $region5
    $region4: #{tpu_custom_call.1} parent=1 // pred_region
      %s31 = ssub.s32 128, 128
      %32 = vsyncadd [#allocation6], %s31
      %s34 = sshll.u32 [#allocation5], 4
      %s35 = int_to_ptr.vmem [resolvable:$true] %s34
      %37 = dma.hbm_to_vmem [thread:$0]  %s0, 128, %s35, [#allocation6]
    $region5: #{tpu_custom_call.1} parent=1 // pred_fallthru
      _
    // Predicated region
    $region6: #{tpu_custom_call.1} parent=1 // pred_check
      _
    $region7: #{tpu_custom_call.1} parent=1 // pred_check_branch
      %39 = sbr.rel (0) target = $region9
    $region8: #{tpu_custom_call.1} parent=1 // pred_region
      %s41 = ssub.s32 128, 128
      %42 = vsyncadd [#allocation9], %s41
      %s44 = sshll.u32 [#allocation8], 4
      %s45 = int_to_ptr.vmem [resolvable:$true] %s44
      %47 = dma.hbm_to_vmem [thread:$0]  %s1, 128, %s45, [#allocation9]
    $region9: #{tpu_custom_call.1} parent=1 // pred_fallthru
      _
    // Predicated region
    $region10: #{tpu_custom_call.1} parent=1 // pred_check
      _
    $region11: #{tpu_custom_call.1} parent=1 // pred_check_branch
      %49 = sbr.rel (0) target = $region13
    $region12: #{tpu_custom_call.1} parent=1 // pred_region
      %s51 = ssub.s32 768, 768
      %52 = vsyncadd [#allocation9], %s51
      %s54 = sshll.u32 [#allocation10], 4
      %s55 = int_to_ptr.vmem [resolvable:$true] %s54
      %57 = dma.hbm_to_vmem [thread:$0]  %s2, 768, %s55, [#allocation9]
    $region13: #{tpu_custom_call.1} parent=1 // pred_fallthru
      _
    // Predicated region
    $region14: #{tpu_custom_call.1} parent=1 // pred_check
      _
    $region15: #{tpu_custom_call.1} parent=1 // pred_check_branch
      %59 = sbr.rel (0) target = $region17
    $region16: #{tpu_custom_call.1} parent=1 // pred_region
      _
    $region17: #{tpu_custom_call.1} parent=1 // pred_fallthru
      _
    // Predicated region
    $region18: #{tpu_custom_call.1} parent=1 // pred_check
      _
    $region19: #{tpu_custom_call.1} parent=1 // pred_check_branch
      %61 = sbr.rel (0) target = $region21
    $region20: #{tpu_custom_call.1} parent=1 // pred_region
      %s63 = ssub.s32 6144, 6144
      %64 = vsyncadd [#allocation12], %s63
      %s65 = sshll.u32 [#allocation11], 4
      %s66 = int_to_ptr.vmem [resolvable:$true] %s65
      %71 = dma.hbm_to_vmem [thread:$0]  %s4, 6144, %s66, [#allocation12], 384, 384, 24
    $region21: #{tpu_custom_call.1} parent=1 // pred_fallthru
      _
    // Predicated region
    $region22: #{tpu_custom_call.1} parent=1 // pred_check
      _
    $region23: #{tpu_custom_call.1} parent=1 // pred_check_branch
      %73 = sbr.rel (0) target = $region25
    $region24: #{tpu_custom_call.1} parent=1 // pred_region
      _
    $region25: #{tpu_custom_call.1} parent=1 // pred_fallthru
      _
    // Predicated region
    $region26: #{tpu_custom_call.1} parent=1 // pred_check
      _
    $region27: #{tpu_custom_call.1} parent=1 // pred_check_branch
      %75 = sbr.rel (0) target = $region29
    $region28: #{tpu_custom_call.1} parent=1 // pred_region
      %s77 = ssub.s32 2048, 2048
      %78 = vsyncadd [#allocation12], %s77
      %s79 = sshll.u32 [#allocation13], 4
      %s80 = int_to_ptr.vmem [resolvable:$true] %s79
      %85 = dma.hbm_to_vmem [thread:$0]  %s6, 2048, %s80, [#allocation12], 128, 128, 8
    $region29: #{tpu_custom_call.1} parent=1 // pred_fallthru
      _
    // Predicated region
    $region30: #{tpu_custom_call.1} parent=1 // pred_check
      _
    $region31: #{tpu_custom_call.1} parent=1 // pred_check_branch
      %87 = sbr.rel (0) target = $region33
    $region32: #{tpu_custom_call.1} parent=1 // pred_region
      _
    $region33: #{tpu_custom_call.1} parent=1 // pred_fallthru
      _
    // Predicated region
    $region34: #{tpu_custom_call.1} parent=1 // pred_check
      _
    $region35: #{tpu_custom_call.1} parent=1 // pred_check_branch
      %89 = sbr.rel (0) target = $region37
    $region36: #{tpu_custom_call.1} parent=1 // pred_region
      %s91 = ssub.s32 6144, 6144
      %92 = vsyncadd [#allocation15], %s91
      %s93 = sshll.u32 [#allocation14], 4
      %s94 = int_to_ptr.vmem [resolvable:$true] %s93
      %99 = dma.hbm_to_vmem [thread:$0]  %s8, 6144, %s94, [#allocation15], 384, 384, 24
    $region37: #{tpu_custom_call.1} parent=1 // pred_fallthru
      _
    // Predicated region
    $region38: #{tpu_custom_call.1} parent=1 // pred_check
      _
    $region39: #{tpu_custom_call.1} parent=1 // pred_check_branch
      %101 = sbr.rel (0) target = $region41
    $region40: #{tpu_custom_call.1} parent=1 // pred_region
      _
    $region41: #{tpu_custom_call.1} parent=1 // pred_fallthru
      _
    // Predicated region
    $region42: #{tpu_custom_call.1} parent=1 // pred_check
      _
    $region43: #{tpu_custom_call.1} parent=1 // pred_check_branch
      %103 = sbr.rel (0) target = $region45
    $region44: #{tpu_custom_call.1} parent=1 // pred_region
      _
    $region45: #{tpu_custom_call.1} parent=1 // pred_fallthru
      _
    // Predicated region
    $region46: #{tpu_custom_call.1} parent=1 // pred_check
      _
    $region47: #{tpu_custom_call.1} parent=1 // pred_check_branch
      %105 = sbr.rel (0) target = $region49
    $region48: #{tpu_custom_call.1} parent=1 // pred_region
      _
    $region49: #{tpu_custom_call.1} parent=1 // pred_fallthru
      _
    // Predicated region
    $region50: #{tpu_custom_call.1} parent=1 // pred_check
      _
    $region51: #{tpu_custom_call.1} parent=1 // pred_check_branch
      %107 = sbr.rel (0) target = $region53
    $region52: #{tpu_custom_call.1} parent=1 // pred_region
      _
    $region53: #{tpu_custom_call.1} parent=1 // pred_fallthru
      _
    // Predicated region
    $region54: #{tpu_custom_call.1} parent=1 // pred_check
      _
    $region55: #{tpu_custom_call.1} parent=1 // pred_check_branch
      %109 = sbr.rel (0) target = $region57
    $region56: #{tpu_custom_call.1} parent=1 // pred_region
      %110 = dma.done [#allocation6], 128
    $region57: #{tpu_custom_call.1} parent=1 // pred_fallthru
      _
    // Predicated region
    $region58: #{tpu_custom_call.1} parent=1 // pred_check
      _
    $region59: #{tpu_custom_call.1} parent=1 // pred_check_branch
      %112 = sbr.rel (0) target = $region61
    $region60: #{tpu_custom_call.1} parent=1 // pred_region
      %113 = dma.done [#allocation9], 128
    $region61: #{tpu_custom_call.1} parent=1 // pred_fallthru
      _
    // Predicated region
    $region62: #{tpu_custom_call.1} parent=1 // pred_check
      _
    $region63: #{tpu_custom_call.1} parent=1 // pred_check_branch
      %115 = sbr.rel (0) target = $region65
    $region64: #{tpu_custom_call.1} parent=1 // pred_region
      %116 = dma.done [#allocation9], 768
    $region65: #{tpu_custom_call.1} parent=1 // pred_fallthru
      _
    // Predicated region
    $region66: #{tpu_custom_call.1} parent=1 // pred_check
      _
    $region67: #{tpu_custom_call.1} parent=1 // pred_check_branch
      %118 = sbr.rel (0) target = $region69
    $region68: #{tpu_custom_call.1} parent=1 // pred_region
      %119 = dma.done [#allocation12], 6144
    $region69: #{tpu_custom_call.1} parent=1 // pred_fallthru
      _
    // Predicated region
    $region70: #{tpu_custom_call.1} parent=1 // pred_check
      _
    $region71: #{tpu_custom_call.1} parent=1 // pred_check_branch
      %121 = sbr.rel (0) target = $region73
    $region72: #{tpu_custom_call.1} parent=1 // pred_region
      %122 = dma.done [#allocation12], 2048
    $region73: #{tpu_custom_call.1} parent=1 // pred_fallthru
      _
    // Predicated region
    $region74: #{tpu_custom_call.1} parent=1 // pred_check
      _
    $region75: #{tpu_custom_call.1} parent=1 // pred_check_branch
      %124 = sbr.rel (0) target = $region77
    $region76: #{tpu_custom_call.1} parent=1 // pred_region
      %125 = dma.done [#allocation15], 6144
    $region77: #{tpu_custom_call.1} parent=1 // pred_fallthru
      _
    %v126 = vld [vmem:[#allocation5] sm:$0xff]
    %v127 = vld [vmem:[#allocation10] sm:$0xff]
    %v128 = vld [vmem:[#allocation10 + $0x8] sm:$0xff]
    %v129 = vld [vmem:[#allocation10 + $0x10] sm:$0xff]
    %v130 = vld [vmem:[#allocation10 + $0x18] sm:$0xff]
    %v131 = vld [vmem:[#allocation10 + $0x20] sm:$0xff]
    %v132 = vld [vmem:[#allocation10 + $0x28] sm:$0xff]
    %v133 = vld [vmem:[%s3] sm:$0x3f]
    %v135 = vlaneseq
    %v136 = vshrl.u32 %v135, 7
    %v137 = vsub.s32 0, %v136
    %v138 = vrot.slane %v133, %v137
    %v139 = vlaneseq
    %v140 = vshrl.u32 %v139, 7
    %v141 = vsub.s32 1, %v140
    %v142 = vrot.slane %v133, %v141
    %v143 = vlaneseq
    %v144 = vshrl.u32 %v143, 7
    %v145 = vsub.s32 2, %v144
    %v146 = vrot.slane %v133, %v145
    %v147 = vlaneseq
    %v148 = vshrl.u32 %v147, 7
    %v149 = vsub.s32 3, %v148
    %v150 = vrot.slane %v133, %v149
    %v151 = vlaneseq
    %v152 = vshrl.u32 %v151, 7
    %v153 = vsub.s32 4, %v152
    %v154 = vrot.slane %v133, %v153
    %v155 = vlaneseq
    %v156 = vshrl.u32 %v155, 7
    %v157 = vsub.s32 5, %v156
    %v158 = vrot.slane %v133, %v157
    %vm165 = vcmask 64512
    %v167 = vsel %vm165, %v126, 0
    %169 = vmatprep.subr.mxu0 %v128
    %170 = vmatpush1.msra.mxu0 %v127
    %171 = vmatprep.subr.mxu0 0.0
    %172 = vmatpush1.msra.mxu0 0.0
    %173 = vmatprep.subr.mxu0 0.0
    %174 = vmatpush1.msra.mxu0 0.0
    %175 = vmatprep.subr.mxu0 0.0
    %176 = vmatpush1.msra.mxu0 0.0
    %177 = vmatprep.subr.mxu0 0.0
    %178 = vmatpush1.msra.mxu0 0.0
    %179 = vmatprep.subr.mxu0 0.0
    %180 = vmatpush1.msra.mxu0 0.0
    %181 = vmatprep.subr.mxu0 0.0
    %182 = vmatpush1.msra.mxu0 0.0
    %183 = vmatprep.subr.mxu0 0.0
    %184 = vmatpush1.msra.mxu0 0.0
    %185 = vmatprep.subr.mxu0 0.0
    %186 = vmatpush1.msra.mxu0 0.0
    %187 = vmatprep.subr.mxu0 0.0
    %188 = vmatpush1.msra.mxu0 0.0
    %189 = vmatprep.subr.mxu0 0.0
    %190 = vmatpush1.msra.mxu0 0.0
    %191 = vmatprep.subr.mxu0 0.0
    %192 = vmatpush1.msra.mxu0 0.0
    %193 = vmatprep.subr.mxu0 0.0
    %194 = vmatpush1.msra.mxu0 0.0
    %195 = vmatprep.subr.mxu0 0.0
    %196 = vmatpush1.msra.mxu0 0.0
    %197 = vmatprep.subr.mxu0 0.0
    %198 = vmatpush1.msra.mxu0 0.0
    %199 = vmatprep.subr.mxu0 0.0
    %200 = vmatpush1.msra.mxu0 0.0
    %201 = vmatprep.subr.mxu0 0.0
    %202 = vmatpush1.msra.mxu0 0.0
    %203 = vmatprep.subr.mxu0 0.0
    %204 = vmatpush1.msra.mxu0 0.0
    %205 = vmatprep.subr.mxu0 0.0
    %206 = vmatpush1.msra.mxu0 0.0
    %207 = vmatprep.subr.mxu0 0.0
    %208 = vmatpush1.msra.mxu0 0.0
    %209 = vmatprep.subr.mxu0 0.0
    %210 = vmatpush1.msra.mxu0 0.0
    %211 = vmatprep.subr.mxu0 0.0
    %212 = vmatpush1.msra.mxu0 0.0
    %213 = vmatprep.subr.mxu0 0.0
    %214 = vmatpush1.msra.mxu0 0.0
    %215 = vmatprep.subr.mxu0 0.0
    %216 = vmatpush1.msra.mxu0 0.0
    %217 = vmatprep.subr.mxu0 0.0
    %218 = vmatpush1.msra.mxu0 0.0
    %219 = vmatprep.subr.mxu0 0.0
    %220 = vmatpush1.msra.mxu0 0.0
    %221 = vmatprep.subr.mxu0 0.0
    %222 = vmatpush1.msra.mxu0 0.0
    %223 = vmatprep.subr.mxu0 0.0
    %224 = vmatpush1.msra.mxu0 0.0
    %225 = vmatprep.subr.mxu0 0.0
    %226 = vmatpush1.msra.mxu0 0.0
    %227 = vmatprep.subr.mxu0 0.0
    %228 = vmatpush1.msra.mxu0 0.0
    %229 = vmatprep.subr.mxu0 0.0
    %230 = vmatpush1.msra.mxu0 0.0
    %231 = vmatprep.subr.mxu0 0.0
    %232 = vmatpush1.msra.mxu0 0.0
    %233 = vmatprep.mubr.f32.mxu0 0.0
    %234 = vmatmul.mubr.f32.gmra.mrb[0].mxu0 %v167
    %v235 = vpop.f32.mrb[0].mxu0
    %v236 = vadd.f32 %v138, %v235
    %v237 = vpop.f32.mrb[0].mxu0
    %v238 = vadd.f32 %v142, %v237
    %239 = vdwg.mxu0
    %240 = vmatprep.subr.mxu0 %v130
    %241 = vmatpush1.msra.mxu0 %v129
    %242 = vmatprep.subr.mxu0 0.0
    %243 = vmatpush1.msra.mxu0 0.0
    %244 = vmatprep.subr.mxu0 0.0
    %245 = vmatpush1.msra.mxu0 0.0
    %246 = vmatprep.subr.mxu0 0.0
    %247 = vmatpush1.msra.mxu0 0.0
    %248 = vmatprep.subr.mxu0 0.0
    %249 = vmatpush1.msra.mxu0 0.0
    %250 = vmatprep.subr.mxu0 0.0
    %251 = vmatpush1.msra.mxu0 0.0
    %252 = vmatprep.subr.mxu0 0.0
    %253 = vmatpush1.msra.mxu0 0.0
    %254 = vmatprep.subr.mxu0 0.0
    %255 = vmatpush1.msra.mxu0 0.0
    %256 = vmatprep.subr.mxu0 0.0
    %257 = vmatpush1.msra.mxu0 0.0
    %258 = vmatprep.subr.mxu0 0.0
    %259 = vmatpush1.msra.mxu0 0.0
    %260 = vmatprep.subr.mxu0 0.0
    %261 = vmatpush1.msra.mxu0 0.0
    %262 = vmatprep.subr.mxu0 0.0
    %263 = vmatpush1.msra.mxu0 0.0
    %264 = vmatprep.subr.mxu0 0.0
    %265 = vmatpush1.msra.mxu0 0.0
    %266 = vmatprep.subr.mxu0 0.0
    %267 = vmatpush1.msra.mxu0 0.0
    %268 = vmatprep.subr.mxu0 0.0
    %269 = vmatpush1.msra.mxu0 0.0
    %270 = vmatprep.subr.mxu0 0.0
    %271 = vmatpush1.msra.mxu0 0.0
    %272 = vmatprep.subr.mxu0 0.0
    %273 = vmatpush1.msra.mxu0 0.0
    %274 = vmatprep.subr.mxu0 0.0
    %275 = vmatpush1.msra.mxu0 0.0
    %276 = vmatprep.subr.mxu0 0.0
    %277 = vmatpush1.msra.mxu0 0.0
    %278 = vmatprep.subr.mxu0 0.0
    %279 = vmatpush1.msra.mxu0 0.0
    %280 = vmatprep.subr.mxu0 0.0
    %281 = vmatpush1.msra.mxu0 0.0
    %282 = vmatprep.subr.mxu0 0.0
    %283 = vmatpush1.msra.mxu0 0.0
    %284 = vmatprep.subr.mxu0 0.0
    %285 = vmatpush1.msra.mxu0 0.0
    %286 = vmatprep.subr.mxu0 0.0
    %287 = vmatpush1.msra.mxu0 0.0
    %288 = vmatprep.subr.mxu0 0.0
    %289 = vmatpush1.msra.mxu0 0.0
    %290 = vmatprep.subr.mxu0 0.0
    %291 = vmatpush1.msra.mxu0 0.0
    %292 = vmatprep.subr.mxu0 0.0
    %293 = vmatpush1.msra.mxu0 0.0
    %294 = vmatprep.subr.mxu0 0.0
    %295 = vmatpush1.msra.mxu0 0.0
    %296 = vmatprep.subr.mxu0 0.0
    %297 = vmatpush1.msra.mxu0 0.0
    %298 = vmatprep.subr.mxu0 0.0
    %299 = vmatpush1.msra.mxu0 0.0
    %300 = vmatprep.subr.mxu0 0.0
    %301 = vmatpush1.msra.mxu0 0.0
    %302 = vmatprep.subr.mxu0 0.0
    %303 = vmatpush1.msra.mxu0 0.0
    %304 = vmatprep.mubr.f32.mxu0 0.0
    %305 = vmatmul.mubr.f32.gmra.mrb[0].mxu0 %v167
    %v306 = vpop.f32.mrb[0].mxu0
    %v307 = vadd.f32 %v146, %v306
    %v308 = vpop.f32.mrb[0].mxu0
    %v309 = vadd.f32 %v150, %v308
    %310 = vdwg.mxu0
    %311 = vmatprep.subr.mxu0 %v132
    %312 = vmatpush1.msra.mxu0 %v131
    %313 = vmatprep.subr.mxu0 0.0
    %314 = vmatpush1.msra.mxu0 0.0
    %315 = vmatprep.subr.mxu0 0.0
    %316 = vmatpush1.msra.mxu0 0.0
    %317 = vmatprep.subr.mxu0 0.0
    %318 = vmatpush1.msra.mxu0 0.0
    %319 = vmatprep.subr.mxu0 0.0
    %320 = vmatpush1.msra.mxu0 0.0
    %321 = vmatprep.subr.mxu0 0.0
    %322 = vmatpush1.msra.mxu0 0.0
    %323 = vmatprep.subr.mxu0 0.0
    %324 = vmatpush1.msra.mxu0 0.0
    %325 = vmatprep.subr.mxu0 0.0
    %326 = vmatpush1.msra.mxu0 0.0
    %327 = vmatprep.subr.mxu0 0.0
    %328 = vmatpush1.msra.mxu0 0.0
    %329 = vmatprep.subr.mxu0 0.0
    %330 = vmatpush1.msra.mxu0 0.0
    %331 = vmatprep.subr.mxu0 0.0
    %332 = vmatpush1.msra.mxu0 0.0
    %333 = vmatprep.subr.mxu0 0.0
    %334 = vmatpush1.msra.mxu0 0.0
    %335 = vmatprep.subr.mxu0 0.0
    %336 = vmatpush1.msra.mxu0 0.0
    %337 = vmatprep.subr.mxu0 0.0
    %338 = vmatpush1.msra.mxu0 0.0
    %339 = vmatprep.subr.mxu0 0.0
    %340 = vmatpush1.msra.mxu0 0.0
    %341 = vmatprep.subr.mxu0 0.0
    %342 = vmatpush1.msra.mxu0 0.0
    %343 = vmatprep.subr.mxu0 0.0
    %344 = vmatpush1.msra.mxu0 0.0
    %345 = vmatprep.subr.mxu0 0.0
    %346 = vmatpush1.msra.mxu0 0.0
    %347 = vmatprep.subr.mxu0 0.0
    %348 = vmatpush1.msra.mxu0 0.0
    %349 = vmatprep.subr.mxu0 0.0
    %350 = vmatpush1.msra.mxu0 0.0
    %351 = vmatprep.subr.mxu0 0.0
    %352 = vmatpush1.msra.mxu0 0.0
    %353 = vmatprep.subr.mxu0 0.0
    %354 = vmatpush1.msra.mxu0 0.0
    %355 = vmatprep.subr.mxu0 0.0
    %356 = vmatpush1.msra.mxu0 0.0
    %357 = vmatprep.subr.mxu0 0.0
    %358 = vmatpush1.msra.mxu0 0.0
    %359 = vmatprep.subr.mxu0 0.0
    %360 = vmatpush1.msra.mxu0 0.0
    %361 = vmatprep.subr.mxu0 0.0
    %362 = vmatpush1.msra.mxu0 0.0
    %363 = vmatprep.subr.mxu0 0.0
    %364 = vmatpush1.msra.mxu0 0.0
    %365 = vmatprep.subr.mxu0 0.0
    %366 = vmatpush1.msra.mxu0 0.0
    %367 = vmatprep.subr.mxu0 0.0
    %368 = vmatpush1.msra.mxu0 0.0
    %369 = vmatprep.subr.mxu0 0.0
    %370 = vmatpush1.msra.mxu0 0.0
    %371 = vmatprep.subr.mxu0 0.0
    %372 = vmatpush1.msra.mxu0 0.0
    %373 = vmatprep.subr.mxu0 0.0
    %374 = vmatpush1.msra.mxu0 0.0
    %375 = vmatprep.mubr.f32.mxu0 0.0
    %376 = vmatmul.mubr.f32.gmra.mrb[0].mxu0 %v167
    %v377 = vpop.f32.mrb[0].mxu0
    %v378 = vadd.f32 %v154, %v377
    %v379 = vpop.f32.mrb[0].mxu0
    %v380 = vadd.f32 %v158, %v379
    %381 = vdwg.mxu0
    %382 = vst [vmem:[#allocation2] sm:$0xff] %v236
    %383 = vst [vmem:[#allocation2 + $0x8] sm:$0xff] %v238
    %384 = vst [vmem:[#allocation2 + $0x10] sm:$0xff] %v307
    %385 = vst [vmem:[#allocation2 + $0x18] sm:$0xff] %v309
    %386 = vst [vmem:[#allocation2 + $0x20] sm:$0xff] %v378
    %387 = vst [vmem:[#allocation2 + $0x28] sm:$0xff] %v380
    %v388 = vld [vmem:[#allocation11] sm:$0xff]
    %v389 = vld [vmem:[#allocation11 + $0x8] sm:$0xff]
    %v390 = vld [vmem:[#allocation11 + $0x10] sm:$0xff]
    %v391 = vld [vmem:[#allocation11 + $0x18] sm:$0xff]
    %v392 = vld [vmem:[#allocation11 + $0x20] sm:$0xff]
    %v393 = vld [vmem:[#allocation11 + $0x28] sm:$0xff]
    %v394 = vld [vmem:[#allocation11 + $0x30] sm:$0xff]
    %v395 = vld [vmem:[#allocation11 + $0x38] sm:$0xff]
    %v396 = vld [vmem:[#allocation11 + $0x40] sm:$0xff]
    %v397 = vld [vmem:[#allocation11 + $0x48] sm:$0xff]
    %v398 = vld [vmem:[#allocation11 + $0x50] sm:$0xff]
    %v399 = vld [vmem:[#allocation11 + $0x58] sm:$0xff]
    %v400 = vld [vmem:[#allocation11 + $0x60] sm:$0xff]
    %v401 = vld [vmem:[#allocation11 + $0x68] sm:$0xff]
    %v402 = vld [vmem:[#allocation11 + $0x70] sm:$0xff]
    %v403 = vld [vmem:[#allocation11 + $0x78] sm:$0xff]
    %v404 = vld [vmem:[#allocation11 + $0x80] sm:$0xff]
    %v405 = vld [vmem:[#allocation11 + $0x88] sm:$0xff]
    %v406 = vld [vmem:[#allocation11 + $0x90] sm:$0xff]
    %v407 = vld [vmem:[#allocation11 + $0x98] sm:$0xff]
    %v408 = vld [vmem:[#allocation11 + $0xa0] sm:$0xff]
    %v409 = vld [vmem:[#allocation11 + $0xa8] sm:$0xff]
    %v410 = vld [vmem:[#allocation11 + $0xb0] sm:$0xff]
    %v411 = vld [vmem:[#allocation11 + $0xb8] sm:$0xff]
    %v412 = vld [vmem:[#allocation11 + $0xc0] sm:$0xff]
    %v413 = vld [vmem:[#allocation11 + $0xc8] sm:$0xff]
    %v414 = vld [vmem:[#allocation11 + $0xd0] sm:$0xff]
    %v415 = vld [vmem:[#allocation11 + $0xd8] sm:$0xff]
    %v416 = vld [vmem:[#allocation11 + $0xe0] sm:$0xff]
    %v417 = vld [vmem:[#allocation11 + $0xe8] sm:$0xff]
    %v418 = vld [vmem:[#allocation11 + $0xf0] sm:$0xff]
    %v419 = vld [vmem:[#allocation11 + $0xf8] sm:$0xff]
    %v420 = vld [vmem:[#allocation11 + $0x100] sm:$0xff]
    %v421 = vld [vmem:[#allocation11 + $0x108] sm:$0xff]
    %v422 = vld [vmem:[#allocation11 + $0x110] sm:$0xff]
    %v423 = vld [vmem:[#allocation11 + $0x118] sm:$0xff]
    %v424 = vld [vmem:[#allocation11 + $0x120] sm:$0xff]
    %v425 = vld [vmem:[#allocation11 + $0x128] sm:$0xff]
    %v426 = vld [vmem:[#allocation11 + $0x130] sm:$0xff]
    %v427 = vld [vmem:[#allocation11 + $0x138] sm:$0xff]
    %v428 = vld [vmem:[#allocation11 + $0x140] sm:$0xff]
    %v429 = vld [vmem:[#allocation11 + $0x148] sm:$0xff]
    %v430 = vld [vmem:[#allocation11 + $0x150] sm:$0xff]
    %v431 = vld [vmem:[#allocation11 + $0x158] sm:$0xff]
    %v432 = vld [vmem:[#allocation11 + $0x160] sm:$0xff]
    %v433 = vld [vmem:[#allocation11 + $0x168] sm:$0xff]
    %v434 = vld [vmem:[#allocation11 + $0x170] sm:$0xff]
    %v435 = vld [vmem:[#allocation11 + $0x178] sm:$0xff]
    %v436 = vld [vmem:[%s5] sm:$0x1]
    %v437 = vld [vmem:[#allocation8] sm:$0xff]
    %v438 = vld [vmem:[#allocation2] sm:$0xff]
    %v439 = vld [vmem:[#allocation2 + $0x8] sm:$0xff]
    %v440 = vld [vmem:[#allocation2 + $0x10] sm:$0xff]
    %441 = vmatprep.subr.mxu0 %v389
    %442 = vmatpush1.msra.mxu0 %v388
    %443 = vmatprep.subr.mxu0 %v392
    %444 = vmatpush1.msra.mxu0 %v391
    %445 = vmatprep.subr.mxu0 %v395
    %446 = vmatpush1.msra.mxu0 %v394
    %447 = vmatprep.subr.mxu0 %v398
    %448 = vmatpush1.msra.mxu0 %v397
    %449 = vmatprep.subr.mxu0 %v401
    %450 = vmatpush1.msra.mxu0 %v400
    %451 = vmatprep.subr.mxu0 %v404
    %452 = vmatpush1.msra.mxu0 %v403
    %453 = vmatprep.subr.mxu0 %v407
    %454 = vmatpush1.msra.mxu0 %v406
    %455 = vmatprep.subr.mxu0 %v410
    %456 = vmatpush1.msra.mxu0 %v409
    %457 = vmatprep.subr.mxu0 %v413
    %458 = vmatpush1.msra.mxu0 %v412
    %459 = vmatprep.subr.mxu0 %v416
    %460 = vmatpush1.msra.mxu0 %v415
    %461 = vmatprep.subr.mxu0 %v419
    %462 = vmatpush1.msra.mxu0 %v418
    %463 = vmatprep.subr.mxu0 %v422
    %464 = vmatpush1.msra.mxu0 %v421
    %465 = vmatprep.subr.mxu0 %v425
    %466 = vmatpush1.msra.mxu0 %v424
    %467 = vmatprep.subr.mxu0 %v428
    %468 = vmatpush1.msra.mxu0 %v427
    %469 = vmatprep.subr.mxu0 %v431
    %470 = vmatpush1.msra.mxu0 %v430
    %471 = vmatprep.subr.mxu0 %v434
    %472 = vmatpush1.msra.mxu0 %v433
    %473 = vmatprep.subr.mxu0 0.0
    %474 = vmatpush1.msra.mxu0 0.0
    %475 = vmatprep.subr.mxu0 0.0
    %476 = vmatpush1.msra.mxu0 0.0
    %477 = vmatprep.subr.mxu0 0.0
    %478 = vmatpush1.msra.mxu0 0.0
    %479 = vmatprep.subr.mxu0 0.0
    %480 = vmatpush1.msra.mxu0 0.0
    %481 = vmatprep.subr.mxu0 0.0
    %482 = vmatpush1.msra.mxu0 0.0
    %483 = vmatprep.subr.mxu0 0.0
    %484 = vmatpush1.msra.mxu0 0.0
    %485 = vmatprep.subr.mxu0 0.0
    %486 = vmatpush1.msra.mxu0 0.0
    %487 = vmatprep.subr.mxu0 0.0
    %488 = vmatpush1.msra.mxu0 0.0
    %489 = vmatprep.subr.mxu0 0.0
    %490 = vmatpush1.msra.mxu0 0.0
    %491 = vmatprep.subr.mxu0 0.0
    %492 = vmatpush1.msra.mxu0 0.0
    %493 = vmatprep.subr.mxu0 0.0
    %494 = vmatpush1.msra.mxu0 0.0
    %495 = vmatprep.subr.mxu0 0.0
    %496 = vmatpush1.msra.mxu0 0.0
    %497 = vmatprep.subr.mxu0 0.0
    %498 = vmatpush1.msra.mxu0 0.0
    %499 = vmatprep.subr.mxu0 0.0
    %500 = vmatpush1.msra.mxu0 0.0
    %501 = vmatprep.subr.mxu0 0.0
    %502 = vmatpush1.msra.mxu0 0.0
    %503 = vmatprep.subr.mxu0 0.0
    %504 = vmatpush1.msra.mxu0 0.0
    %505 = vmatprep.mubr.f32.mxu0 0.0
    %506 = vmatmul.mubr.f32.gmra.mrb[0].mxu0 %v437
    %v507 = vpop.f32.mrb[0].mxu0
    %v508 = vadd.f32 0.0, %v507
    %v509 = vpop.f32.mrb[0].mxu0
    %v510 = vadd.f32 0.0, %v509
    %511 = vdwg.mxu0
    %512 = vmatprep.subr.mxu0 0.0
    %513 = vmatpush1.msra.mxu0 %v390
    %514 = vmatprep.subr.mxu0 0.0
    %515 = vmatpush1.msra.mxu0 %v393
    %516 = vmatprep.subr.mxu0 0.0
    %517 = vmatpush1.msra.mxu0 %v396
    %518 = vmatprep.subr.mxu0 0.0
    %519 = vmatpush1.msra.mxu0 %v399
    %520 = vmatprep.subr.mxu0 0.0
    %521 = vmatpush1.msra.mxu0 %v402
    %522 = vmatprep.subr.mxu0 0.0
    %523 = vmatpush1.msra.mxu0 %v405
    %524 = vmatprep.subr.mxu0 0.0
    %525 = vmatpush1.msra.mxu0 %v408
    %526 = vmatprep.subr.mxu0 0.0
    %527 = vmatpush1.msra.mxu0 %v411
    %528 = vmatprep.subr.mxu0 0.0
    %529 = vmatpush1.msra.mxu0 %v414
    %530 = vmatprep.subr.mxu0 0.0
    %531 = vmatpush1.msra.mxu0 %v417
    %532 = vmatprep.subr.mxu0 0.0
    %533 = vmatpush1.msra.mxu0 %v420
    %534 = vmatprep.subr.mxu0 0.0
    %535 = vmatpush1.msra.mxu0 %v423
    %536 = vmatprep.subr.mxu0 0.0
    %537 = vmatpush1.msra.mxu0 %v426
    %538 = vmatprep.subr.mxu0 0.0
    %539 = vmatpush1.msra.mxu0 %v429
    %540 = vmatprep.subr.mxu0 0.0
    %541 = vmatpush1.msra.mxu0 %v432
    %542 = vmatprep.subr.mxu0 0.0
    %543 = vmatpush1.msra.mxu0 %v435
    %544 = vmatprep.subr.mxu0 0.0
    %545 = vmatpush1.msra.mxu0 0.0
    %546 = vmatprep.subr.mxu0 0.0
    %547 = vmatpush1.msra.mxu0 0.0
    %548 = vmatprep.subr.mxu0 0.0
    %549 = vmatpush1.msra.mxu0 0.0
    %550 = vmatprep.subr.mxu0 0.0
    %551 = vmatpush1.msra.mxu0 0.0
    %552 = vmatprep.subr.mxu0 0.0
    %553 = vmatpush1.msra.mxu0 0.0
    %554 = vmatprep.subr.mxu0 0.0
    %555 = vmatpush1.msra.mxu0 0.0
    %556 = vmatprep.subr.mxu0 0.0
    %557 = vmatpush1.msra.mxu0 0.0
    %558 = vmatprep.subr.mxu0 0.0
    %559 = vmatpush1.msra.mxu0 0.0
    %560 = vmatprep.subr.mxu0 0.0
    %561 = vmatpush1.msra.mxu0 0.0
    %562 = vmatprep.subr.mxu0 0.0
    %563 = vmatpush1.msra.mxu0 0.0
    %564 = vmatprep.subr.mxu0 0.0
    %565 = vmatpush1.msra.mxu0 0.0
    %566 = vmatprep.subr.mxu0 0.0
    %567 = vmatpush1.msra.mxu0 0.0
    %568 = vmatprep.subr.mxu0 0.0
    %569 = vmatpush1.msra.mxu0 0.0
    %570 = vmatprep.subr.mxu0 0.0
    %571 = vmatpush1.msra.mxu0 0.0
    %572 = vmatprep.subr.mxu0 0.0
    %573 = vmatpush1.msra.mxu0 0.0
    %574 = vmatprep.subr.mxu0 0.0
    %575 = vmatpush1.msra.mxu0 0.0
    %576 = vmatprep.mubr.f32.mxu0 0.0
    %577 = vmatmul.mubr.f32.gmra.mrb[0].mxu0 %v437
    %v578 = vpop.f32.mrb[0].mxu0
    %v579 = vadd.f32 0.0, %v578
    %v580 = vpop.f32.mrb[0].mxu0
    %581 = vdwg.mxu0
    %v582 = vadd.f32 %v438, %v508
    %v583 = vxor.u32 %v582, 2147483648
    %v584 = vmul.f32 %v583, 1.442695
    %v585 = vpow.pop %v584
    %v586 = vadd.f32 %v585, 1.0
    %v587 = vrcp.pop %v586
    %v588 = vmul.f32 1.0, %v587
    %v589 = vadd.f32 %v439, %v510
    %v590 = vxor.u32 %v589, 2147483648
    %v591 = vmul.f32 %v590, 1.442695
    %v592 = vpow.pop %v591
    %v593 = vadd.f32 %v592, 1.0
    %v594 = vrcp.pop %v593
    %v595 = vmul.f32 1.0, %v594
    %v597 = vlaneseq
    %v598 = vshrl.u32 %v597, 7
    %v599 = vsub.s32 0, %v598
    %v600 = vrot.slane %v436, %v599
    %v602 = vadd.f32 %v579, %v600
    %v603 = vmul.f32 %v588, %v602
    %v604 = vadd.f32 %v440, %v603
    %v605 = vtanh.pop %v604
    %v606 = vsub.f32 1.0, %v595
    %v607 = vmul.f32 %v606, %v605
    %v608 = vmul.f32 %v595, %v437
    %v609 = vadd.f32 %v607, %v608
    %610 = vst [vmem:[#allocation3] sm:$0xff] %v609
    %611 = vst [vmem:[#allocation17] sm:$0xff] %v609
    %v612 = vld [vmem:[#allocation3] sm:$0xff]
    %v613 = vld [vmem:[#allocation13] sm:$0xff]
    %v614 = vld [vmem:[#allocation13 + $0x8] sm:$0xff]
    %v615 = vld [vmem:[#allocation13 + $0x10] sm:$0xff]
    %v616 = vld [vmem:[#allocation13 + $0x18] sm:$0xff]
    %v617 = vld [vmem:[#allocation13 + $0x20] sm:$0xff]
    %v618 = vld [vmem:[#allocation13 + $0x28] sm:$0xff]
    %v619 = vld [vmem:[#allocation13 + $0x30] sm:$0xff]
    %v620 = vld [vmem:[#allocation13 + $0x38] sm:$0xff]
    %v621 = vld [vmem:[#allocation13 + $0x40] sm:$0xff]
    %v622 = vld [vmem:[#allocation13 + $0x48] sm:$0xff]
    %v623 = vld [vmem:[#allocation13 + $0x50] sm:$0xff]
    %v624 = vld [vmem:[#allocation13 + $0x58] sm:$0xff]
    %v625 = vld [vmem:[#allocation13 + $0x60] sm:$0xff]
    %v626 = vld [vmem:[#allocation13 + $0x68] sm:$0xff]
    %v627 = vld [vmem:[#allocation13 + $0x70] sm:$0xff]
    %v628 = vld [vmem:[#allocation13 + $0x78] sm:$0xff]
    %v629 = vld [vmem:[%s7] sm:$0x1]
    %v631 = vlaneseq
    %v632 = vshrl.u32 %v631, 7
    %v633 = vsub.s32 0, %v632
    %v634 = vrot.slane %v629, %v633
    %636 = vmatprep.subr.mxu0 0.0
    %637 = vmatpush1.msra.mxu0 %v613
    %638 = vmatprep.subr.mxu0 0.0
    %639 = vmatpush1.msra.mxu0 %v614
    %640 = vmatprep.subr.mxu0 0.0
    %641 = vmatpush1.msra.mxu0 %v615
    %642 = vmatprep.subr.mxu0 0.0
    %643 = vmatpush1.msra.mxu0 %v616
    %644 = vmatprep.subr.mxu0 0.0
    %645 = vmatpush1.msra.mxu0 %v617
    %646 = vmatprep.subr.mxu0 0.0
    %647 = vmatpush1.msra.mxu0 %v618
    %648 = vmatprep.subr.mxu0 0.0
    %649 = vmatpush1.msra.mxu0 %v619
    %650 = vmatprep.subr.mxu0 0.0
    %651 = vmatpush1.msra.mxu0 %v620
    %652 = vmatprep.subr.mxu0 0.0
    %653 = vmatpush1.msra.mxu0 %v621
    %654 = vmatprep.subr.mxu0 0.0
    %655 = vmatpush1.msra.mxu0 %v622
    %656 = vmatprep.subr.mxu0 0.0
    %657 = vmatpush1.msra.mxu0 %v623
    %658 = vmatprep.subr.mxu0 0.0
    %659 = vmatpush1.msra.mxu0 %v624
    %660 = vmatprep.subr.mxu0 0.0
    %661 = vmatpush1.msra.mxu0 %v625
    %662 = vmatprep.subr.mxu0 0.0
    %663 = vmatpush1.msra.mxu0 %v626
    %664 = vmatprep.subr.mxu0 0.0
    %665 = vmatpush1.msra.mxu0 %v627
    %666 = vmatprep.subr.mxu0 0.0
    %667 = vmatpush1.msra.mxu0 %v628
    %668 = vmatprep.subr.mxu0 0.0
    %669 = vmatpush1.msra.mxu0 0.0
    %670 = vmatprep.subr.mxu0 0.0
    %671 = vmatpush1.msra.mxu0 0.0
    %672 = vmatprep.subr.mxu0 0.0
    %673 = vmatpush1.msra.mxu0 0.0
    %674 = vmatprep.subr.mxu0 0.0
    %675 = vmatpush1.msra.mxu0 0.0
    %676 = vmatprep.subr.mxu0 0.0
    %677 = vmatpush1.msra.mxu0 0.0
    %678 = vmatprep.subr.mxu0 0.0
    %679 = vmatpush1.msra.mxu0 0.0
    %680 = vmatprep.subr.mxu0 0.0
    %681 = vmatpush1.msra.mxu0 0.0
    %682 = vmatprep.subr.mxu0 0.0
    %683 = vmatpush1.msra.mxu0 0.0
    %684 = vmatprep.subr.mxu0 0.0
    %685 = vmatpush1.msra.mxu0 0.0
    %686 = vmatprep.subr.mxu0 0.0
    %687 = vmatpush1.msra.mxu0 0.0
    %688 = vmatprep.subr.mxu0 0.0
    %689 = vmatpush1.msra.mxu0 0.0
    %690 = vmatprep.subr.mxu0 0.0
    %691 = vmatpush1.msra.mxu0 0.0
    %692 = vmatprep.subr.mxu0 0.0
    %693 = vmatpush1.msra.mxu0 0.0
    %694 = vmatprep.subr.mxu0 0.0
    %695 = vmatpush1.msra.mxu0 0.0
    %696 = vmatprep.subr.mxu0 0.0
    %697 = vmatpush1.msra.mxu0 0.0
    %698 = vmatprep.subr.mxu0 0.0
    %699 = vmatpush1.msra.mxu0 0.0
    %700 = vmatprep.mubr.f32.mxu0 0.0
    %701 = vmatmul.mubr.f32.gmra.mrb[0].mxu0 %v612
    %v702 = vpop.f32.mrb[0].mxu0
    %v703 = vadd.f32 %v634, %v702
    %v704 = vpop.f32.mrb[0].mxu0
    %705 = vdwg.mxu0
    %706 = vmax.xlane.f32.xlu0 %v703
    %v707 = vpop.xlane.xlu0 %706
    %v708 = vsub.f32 %v703, %v707
    %v709 = vmul.f32 %v708, 1.442695
    %v710 = vpow.pop %v709
    %711 = vadd.xlane.f32.xlu0 %v710
    %v712 = vpop.xlane.xlu0 %711
    %v713 = vrcp.pop %v712
    %v714 = vmul.f32 %v712, %v713
    %v715 = vsub.f32 2.0, %v714
    %v716 = vmul.f32 %v713, %v715
    %v717 = vmul.f32 %v710, %v716
    %v718 = vld [vmem:[#allocation2 + $0x18] sm:$0xff]
    %v719 = vld [vmem:[#allocation2 + $0x20] sm:$0xff]
    %v720 = vld [vmem:[#allocation2 + $0x28] sm:$0xff]
    %v721 = vld [vmem:[#allocation14] sm:$0xff]
    %v722 = vld [vmem:[#allocation14 + $0x8] sm:$0xff]
    %v723 = vld [vmem:[#allocation14 + $0x10] sm:$0xff]
    %v724 = vld [vmem:[#allocation14 + $0x18] sm:$0xff]
    %v725 = vld [vmem:[#allocation14 + $0x20] sm:$0xff]
    %v726 = vld [vmem:[#allocation14 + $0x28] sm:$0xff]
    %v727 = vld [vmem:[#allocation14 + $0x30] sm:$0xff]
    %v728 = vld [vmem:[#allocation14 + $0x38] sm:$0xff]
    %v729 = vld [vmem:[#allocation14 + $0x40] sm:$0xff]
    %v730 = vld [vmem:[#allocation14 + $0x48] sm:$0xff]
    %v731 = vld [vmem:[#allocation14 + $0x50] sm:$0xff]
    %v732 = vld [vmem:[#allocation14 + $0x58] sm:$0xff]
    %v733 = vld [vmem:[#allocation14 + $0x60] sm:$0xff]
    %v734 = vld [vmem:[#allocation14 + $0x68] sm:$0xff]
    %v735 = vld [vmem:[#allocation14 + $0x70] sm:$0xff]
    %v736 = vld [vmem:[#allocation14 + $0x78] sm:$0xff]
    %v737 = vld [vmem:[#allocation14 + $0x80] sm:$0xff]
    %v738 = vld [vmem:[#allocation14 + $0x88] sm:$0xff]
    %v739 = vld [vmem:[#allocation14 + $0x90] sm:$0xff]
    %v740 = vld [vmem:[#allocation14 + $0x98] sm:$0xff]
    %v741 = vld [vmem:[#allocation14 + $0xa0] sm:$0xff]
    %v742 = vld [vmem:[#allocation14 + $0xa8] sm:$0xff]
    %v743 = vld [vmem:[#allocation14 + $0xb0] sm:$0xff]
    %v744 = vld [vmem:[#allocation14 + $0xb8] sm:$0xff]
    %v745 = vld [vmem:[#allocation14 + $0xc0] sm:$0xff]
    %v746 = vld [vmem:[#allocation14 + $0xc8] sm:$0xff]
    %v747 = vld [vmem:[#allocation14 + $0xd0] sm:$0xff]
    %v748 = vld [vmem:[#allocation14 + $0xd8] sm:$0xff]
    %v749 = vld [vmem:[#allocation14 + $0xe0] sm:$0xff]
    %v750 = vld [vmem:[#allocation14 + $0xe8] sm:$0xff]
    %v751 = vld [vmem:[#allocation14 + $0xf0] sm:$0xff]
    %v752 = vld [vmem:[#allocation14 + $0xf8] sm:$0xff]
    %v753 = vld [vmem:[#allocation14 + $0x100] sm:$0xff]
    %v754 = vld [vmem:[#allocation14 + $0x108] sm:$0xff]
    %v755 = vld [vmem:[#allocation14 + $0x110] sm:$0xff]
    %v756 = vld [vmem:[#allocation14 + $0x118] sm:$0xff]
    %v757 = vld [vmem:[#allocation14 + $0x120] sm:$0xff]
    %v758 = vld [vmem:[#allocation14 + $0x128] sm:$0xff]
    %v759 = vld [vmem:[#allocation14 + $0x130] sm:$0xff]
    %v760 = vld [vmem:[#allocation14 + $0x138] sm:$0xff]
    %v761 = vld [vmem:[#allocation14 + $0x140] sm:$0xff]
    %v762 = vld [vmem:[#allocation14 + $0x148] sm:$0xff]
    %v763 = vld [vmem:[#allocation14 + $0x150] sm:$0xff]
    %v764 = vld [vmem:[#allocation14 + $0x158] sm:$0xff]
    %v765 = vld [vmem:[#allocation14 + $0x160] sm:$0xff]
    %v766 = vld [vmem:[#allocation14 + $0x168] sm:$0xff]
    %v767 = vld [vmem:[#allocation14 + $0x170] sm:$0xff]
    %v768 = vld [vmem:[#allocation14 + $0x178] sm:$0xff]
    %769 = vmatprep.subr.mxu0 %v722
    %770 = vmatpush1.msra.mxu0 %v721
    %771 = vmatprep.subr.mxu0 %v725
    %772 = vmatpush1.msra.mxu0 %v724
    %773 = vmatprep.subr.mxu0 %v728
    %774 = vmatpush1.msra.mxu0 %v727
    %775 = vmatprep.subr.mxu0 %v731
    %776 = vmatpush1.msra.mxu0 %v730
    %777 = vmatprep.subr.mxu0 %v734
    %778 = vmatpush1.msra.mxu0 %v733
    %779 = vmatprep.subr.mxu0 %v737
    %780 = vmatpush1.msra.mxu0 %v736
    %781 = vmatprep.subr.mxu0 %v740
    %782 = vmatpush1.msra.mxu0 %v739
    %783 = vmatprep.subr.mxu0 %v743
    %784 = vmatpush1.msra.mxu0 %v742
    %785 = vmatprep.subr.mxu0 %v746
    %786 = vmatpush1.msra.mxu0 %v745
    %787 = vmatprep.subr.mxu0 %v749
    %788 = vmatpush1.msra.mxu0 %v748
    %789 = vmatprep.subr.mxu0 %v752
    %790 = vmatpush1.msra.mxu0 %v751
    %791 = vmatprep.subr.mxu0 %v755
    %792 = vmatpush1.msra.mxu0 %v754
    %793 = vmatprep.subr.mxu0 %v758
    %794 = vmatpush1.msra.mxu0 %v757
    %795 = vmatprep.subr.mxu0 %v761
    %796 = vmatpush1.msra.mxu0 %v760
    %797 = vmatprep.subr.mxu0 %v764
    %798 = vmatpush1.msra.mxu0 %v763
    %799 = vmatprep.subr.mxu0 %v767
    %800 = vmatpush1.msra.mxu0 %v766
    %801 = vmatprep.subr.mxu0 0.0
    %802 = vmatpush1.msra.mxu0 0.0
    %803 = vmatprep.subr.mxu0 0.0
    %804 = vmatpush1.msra.mxu0 0.0
    %805 = vmatprep.subr.mxu0 0.0
    %806 = vmatpush1.msra.mxu0 0.0
    %807 = vmatprep.subr.mxu0 0.0
    %808 = vmatpush1.msra.mxu0 0.0
    %809 = vmatprep.subr.mxu0 0.0
    %810 = vmatpush1.msra.mxu0 0.0
    %811 = vmatprep.subr.mxu0 0.0
    %812 = vmatpush1.msra.mxu0 0.0
    %813 = vmatprep.subr.mxu0 0.0
    %814 = vmatpush1.msra.mxu0 0.0
    %815 = vmatprep.subr.mxu0 0.0
    %816 = vmatpush1.msra.mxu0 0.0
    %817 = vmatprep.subr.mxu0 0.0
    %818 = vmatpush1.msra.mxu0 0.0
    %819 = vmatprep.subr.mxu0 0.0
    %820 = vmatpush1.msra.mxu0 0.0
    %821 = vmatprep.subr.mxu0 0.0
    %822 = vmatpush1.msra.mxu0 0.0
    %823 = vmatprep.subr.mxu0 0.0
    %824 = vmatpush1.msra.mxu0 0.0
    %825 = vmatprep.subr.mxu0 0.0
    %826 = vmatpush1.msra.mxu0 0.0
    %827 = vmatprep.subr.mxu0 0.0
    %828 = vmatpush1.msra.mxu0 0.0
    %829 = vmatprep.subr.mxu0 0.0
    %830 = vmatpush1.msra.mxu0 0.0
    %831 = vmatprep.subr.mxu0 0.0
    %832 = vmatpush1.msra.mxu0 0.0
    %833 = vmatprep.mubr.f32.mxu0 0.0
    %834 = vmatmul.mubr.f32.gmra.mrb[0].mxu0 %v612
    %v835 = vpop.f32.mrb[0].mxu0
    %v836 = vadd.f32 0.0, %v835
    %v837 = vpop.f32.mrb[0].mxu0
    %v838 = vadd.f32 0.0, %v837
    %839 = vdwg.mxu0
    %840 = vmatprep.subr.mxu0 0.0
    %841 = vmatpush1.msra.mxu0 %v723
    %842 = vmatprep.subr.mxu0 0.0
    %843 = vmatpush1.msra.mxu0 %v726
    %844 = vmatprep.subr.mxu0 0.0
    %845 = vmatpush1.msra.mxu0 %v729
    %846 = vmatprep.subr.mxu0 0.0
    %847 = vmatpush1.msra.mxu0 %v732
    %848 = vmatprep.subr.mxu0 0.0
    %849 = vmatpush1.msra.mxu0 %v735
    %850 = vmatprep.subr.mxu0 0.0
    %851 = vmatpush1.msra.mxu0 %v738
    %852 = vmatprep.subr.mxu0 0.0
    %853 = vmatpush1.msra.mxu0 %v741
    %854 = vmatprep.subr.mxu0 0.0
    %855 = vmatpush1.msra.mxu0 %v744
    %856 = vmatprep.subr.mxu0 0.0
    %857 = vmatpush1.msra.mxu0 %v747
    %858 = vmatprep.subr.mxu0 0.0
    %859 = vmatpush1.msra.mxu0 %v750
    %860 = vmatprep.subr.mxu0 0.0
    %861 = vmatpush1.msra.mxu0 %v753
    %862 = vmatprep.subr.mxu0 0.0
    %863 = vmatpush1.msra.mxu0 %v756
    %864 = vmatprep.subr.mxu0 0.0
    %865 = vmatpush1.msra.mxu0 %v759
    %866 = vmatprep.subr.mxu0 0.0
    %867 = vmatpush1.msra.mxu0 %v762
    %868 = vmatprep.subr.mxu0 0.0
    %869 = vmatpush1.msra.mxu0 %v765
    %870 = vmatprep.subr.mxu0 0.0
    %871 = vmatpush1.msra.mxu0 %v768
    %872 = vmatprep.subr.mxu0 0.0
    %873 = vmatpush1.msra.mxu0 0.0
    %874 = vmatprep.subr.mxu0 0.0
    %875 = vmatpush1.msra.mxu0 0.0
    %876 = vmatprep.subr.mxu0 0.0
    %877 = vmatpush1.msra.mxu0 0.0
    %878 = vmatprep.subr.mxu0 0.0
    %879 = vmatpush1.msra.mxu0 0.0
    %880 = vmatprep.subr.mxu0 0.0
    %881 = vmatpush1.msra.mxu0 0.0
    %882 = vmatprep.subr.mxu0 0.0
    %883 = vmatpush1.msra.mxu0 0.0
    %884 = vmatprep.subr.mxu0 0.0
    %885 = vmatpush1.msra.mxu0 0.0
    %886 = vmatprep.subr.mxu0 0.0
    %887 = vmatpush1.msra.mxu0 0.0
    %888 = vmatprep.subr.mxu0 0.0
    %889 = vmatpush1.msra.mxu0 0.0
    %890 = vmatprep.subr.mxu0 0.0
    %891 = vmatpush1.msra.mxu0 0.0
    %892 = vmatprep.subr.mxu0 0.0
    %893 = vmatpush1.msra.mxu0 0.0
    %894 = vmatprep.subr.mxu0 0.0
    %895 = vmatpush1.msra.mxu0 0.0
    %896 = vmatprep.subr.mxu0 0.0
    %897 = vmatpush1.msra.mxu0 0.0
    %898 = vmatprep.subr.mxu0 0.0
    %899 = vmatpush1.msra.mxu0 0.0
    %900 = vmatprep.subr.mxu0 0.0
    %901 = vmatpush1.msra.mxu0 0.0
    %902 = vmatprep.subr.mxu0 0.0
    %903 = vmatpush1.msra.mxu0 0.0
    %904 = vmatprep.mubr.f32.mxu0 0.0
    %905 = vmatmul.mubr.f32.gmra.mrb[0].mxu0 %v612
    %v906 = vpop.f32.mrb[0].mxu0
    %v907 = vadd.f32 0.0, %v906
    %v908 = vpop.f32.mrb[0].mxu0
    %909 = vdwg.mxu0
    %v910 = vadd.f32 %v718, %v836
    %v911 = vxor.u32 %v910, 2147483648
    %v912 = vmul.f32 %v911, 1.442695
    %v913 = vpow.pop %v912
    %v914 = vadd.f32 %v913, 1.0
    %v915 = vrcp.pop %v914
    %v916 = vmul.f32 1.0, %v915
    %v917 = vadd.f32 %v719, %v838
    %v918 = vxor.u32 %v917, 2147483648
    %v919 = vmul.f32 %v918, 1.442695
    %v920 = vpow.pop %v919
    %v921 = vadd.f32 %v920, 1.0
    %v922 = vrcp.pop %v921
    %v923 = vmul.f32 1.0, %v922
    %v924 = vld [vmem:[%s9] sm:$0x1]
    %v926 = vlaneseq
    %v927 = vshrl.u32 %v926, 7
    %v928 = vsub.s32 0, %v927
    %v929 = vrot.slane %v924, %v928
    %v931 = vadd.f32 %v907, %v929
    %v932 = vmul.f32 %v916, %v931
    %v933 = vadd.f32 %v720, %v932
    %v934 = vtanh.pop %v933
    %v935 = vsub.f32 1.0, %v923
    %v936 = vmul.f32 %v935, %v934
    %v937 = vmul.f32 %v923, %v612
    %v938 = vadd.f32 %v936, %v937
    %v939 = vld [vmem:[%s10] sm:$0x1]
    %v941 = vlaneseq
    %v942 = vshrl.u32 %v941, 7
    %v943 = vsub.s32 0, %v942
    %v944 = vrot.slane %v939, %v943
    %v946 = vmul.f32 %v938, %v944
    %947 = vadd.xlane.f32.xlu0 %v946
    %v948 = vpop.xlane.xlu0 %947
    %v949 = vld [vmem:[#allocation4] sm:$0x1]
    %v951 = vlaneseq
    %v952 = vshrl.u32 %v951, 7
    %v953 = vsub.s32 0, %v952
    %v954 = vrot.slane %v949, %v953
    %v956 = vadd.f32 %v948, %v954
    %v957 = vld [vmem:[%s12] sm:$0x1]
    %959 = vset.pattern.permute.xlu0 0
    %960 = vperm.xlu0 %959, %v956
    %v961 = vpop.permute.xlu0 %960
    %v964 = vlaneseq
    %v965 = vshrl.u32 %v964, 7
    %v966 = vsub.s32 0, %v965
    %v967 = vrot.slane %v957, %v966
    %v969 = vmul.f32 %v961, %v967
    %v970 = vadd.f32 %v717, %v969
    %971 = vst [vmem:[#allocation16] sm:$0xff] %v970
    // Predicated region
    $region78: #{tpu_custom_call.1} parent=1 // pred_check
      _
    $region79: #{tpu_custom_call.1} parent=1 // pred_check_branch
      %973 = sbr.rel (0) target = $region81
    $region80: #{tpu_custom_call.1} parent=1 // pred_region
      %s975 = ssub.s32 128, 128
      %976 = vsyncadd [#allocation7], %s975
      %s978 = sshll.u32 [#allocation16], 4
      %s979 = int_to_ptr.vmem [resolvable:$true] %s978
      %981 = dma.vmem_to_hbm [thread:$0]  %s979, 128, %s13, [#allocation7]
    $region81: #{tpu_custom_call.1} parent=1 // pred_fallthru
      _
    // Predicated region
    $region82: #{tpu_custom_call.1} parent=1 // pred_check
      _
    $region83: #{tpu_custom_call.1} parent=1 // pred_check_branch
      %983 = sbr.rel (0) target = $region85
    $region84: #{tpu_custom_call.1} parent=1 // pred_region
      %s985 = ssub.s32 128, 128
      %986 = vsyncadd [#allocation18], %s985
      %s988 = sshll.u32 [#allocation17], 4
      %s989 = int_to_ptr.vmem [resolvable:$true] %s988
      %991 = dma.vmem_to_hbm [thread:$0]  %s989, 128, %s14, [#allocation18]
    $region85: #{tpu_custom_call.1} parent=1 // pred_fallthru
      _
    // Predicated region
    $region86: #{tpu_custom_call.1} parent=1 // pred_check
      _
    $region87: #{tpu_custom_call.1} parent=1 // pred_check_branch
      %993 = sbr.rel (0) target = $region89
    $region88: #{tpu_custom_call.1} parent=1 // pred_region
      %994 = dma.done [#allocation7], 128
    $region89: #{tpu_custom_call.1} parent=1 // pred_fallthru
      _
    // Predicated region
    $region90: #{tpu_custom_call.1} parent=1 // pred_check
      _
    $region91: #{tpu_custom_call.1} parent=1 // pred_check_branch
      %996 = sbr.rel (0) target = $region93
    $region92: #{tpu_custom_call.1} parent=1 // pred_region
      %997 = dma.done [#allocation18], 128
    $region93: #{tpu_custom_call.1} parent=1 // pred_fallthru
      _
    %998 = vsyncpa [#allocation6], 1
    %999 = vsyncpa [#allocation9], 1
    %1000 = vsyncpa [#allocation12], 1
    %1001 = vsyncpa [#allocation15], 1
    %1002 = vsyncpa [#allocation7], 1
    %1003 = vsyncpa [#allocation18], 1

</llo_original>
